<compile_context>
chip_gen: v5e
topology: v5e:2x2
jax: 0.10.0
libtpu: 0.0.40
codegen_flags: <defaults>
</compile_context>

<pallas_src>
import jax
import jax.numpy as jnp
from jax.experimental import pallas as pl
from jax.experimental.pallas import tpu as pltpu


def _round_up(x, m):
    return ((x + m - 1) // m) * m


def expert_kernel(x_ref, w1_ref, b1_ref, w2_ref, b2_ref, o_ref):
    # x_ref:  (tm, E_p)  bf16   (resident across k)
    # w1_ref: (E_p, th)  bf16       b1_ref: (1, th)  f32
    # w2_ref: (th, E_p)  bf16       b2_ref: (1, E_p) f32  (resident)
    # o_ref:  (tm, E_p)  f32    (resident across k -> doubles as accumulator)
    k = pl.program_id(1)

    @pl.when(k == 0)
    def _():
        # Fold the output bias into the accumulator init; the output tile is
        # resident across the reduction axis so this write happens once per
        # token tile and removes the epilogue bias-add + copy.
        o_ref[...] = jnp.broadcast_to(b2_ref[...], o_ref.shape)

    # Linear 1 slab + bias + ReLU (MXU bf16 operands -> f32 acc; VPU in f32).
    h = jnp.dot(x_ref[...], w1_ref[...], preferred_element_type=jnp.float32)
    h = jnp.maximum(h + b1_ref[...], 0.0)

    # Linear 2 slab, accumulated directly into the resident output tile.
    o_ref[...] += jnp.dot(
        h.astype(w2_ref.dtype), w2_ref[...], preferred_element_type=jnp.float32
    )
    # Dropout(0.1) is identity in eval mode (see module-level TODO).


def prepare_expert_params(w1, b1, w2, b2, *, th=512):
    """One-time weight preparation: pad to lane/tile-friendly sizes and cast
    the matmul operands to bf16.  Do this at init, NOT per forward call."""
    E, H = w1.shape
    E_p = _round_up(E, 128)                        # lane-dense embedding dim
    th = max(128, min(th, _round_up(H, 128)))      # hidden tile, multiple of 128
    H_p = _round_up(H, th)

    # Zero padding is mathematically inert for these matmuls (padded W1
    # columns / b1 entries are 0 -> ReLU(0)=0, padded W2 rows are 0).
    w1_p = jnp.pad(w1, ((0, E_p - E), (0, H_p - H))).astype(jnp.bfloat16)
    w2_p = jnp.pad(w2, ((0, H_p - H), (0, E_p - E))).astype(jnp.bfloat16)
    b1_p = jnp.pad(b1.reshape(1, H), ((0, 0), (0, H_p - H))).astype(jnp.float32)
    b2_p = jnp.pad(b2.reshape(1, E), ((0, 0), (0, E_p - E))).astype(jnp.float32)
    return {"w1": w1_p, "b1": b1_p, "w2": w2_p, "b2": b2_p, "th": th}


def expert_forward(x, params, *, tm=512):
    """x: (B, T, E) float32.  params: output of prepare_expert_params.

    tm: token tile (multiple of 8).  512 (or 1024 if N and VMEM permit) is the
    v6e/v7x sweet spot; use 256 on v5e where the kernel is already MXU-bound.
    """
    B, T, E = x.shape
    w1, b1, w2, b2 = params["w1"], params["b1"], params["w2"], params["b2"]
    th = params["th"]
    E_p, H_p = w1.shape
    N = B * T

    # ---- token-tile selection ---------------------------------------------
    tm_eff = max(8, min((tm // 8) * 8, _round_up(N, 8)))
    N_p = _round_up(N, tm_eff)
    # Keep >= 2 parallel token tiles when possible so v7x's 2 TensorCores both
    # get work (megacore sharding over the "parallel" grid axis).
    if N_p // tm_eff < 2 and N > 8:
        tm_eff = max(8, _round_up((N + 1) // 2, 8))
        N_p = _round_up(N, tm_eff)

    # ---- pad + cast activations (weights already prepared) -----------------
    x2d = jnp.pad(x.reshape(N, E), ((0, N_p - N), (0, E_p - E))).astype(jnp.bfloat16)

    # ---- generation-aware VMEM budget from the true tile footprint ---------
    est = (
        2 * tm_eff * E_p * 2      # x tiles (bf16, double-buffered)
        + 2 * E_p * th * 2        # W1 tiles (bf16)
        + 2 * th * E_p * 2        # W2 tiles (bf16)
        + 2 * tm_eff * E_p * 4    # output/accumulator tiles (f32)
        + 2 * 8 * th * 4          # b1 (sublane-padded)
        + 2 * 8 * E_p * 4         # b2 (sublane-padded)
    )
    try:
        vmem_cap = int(getattr(pltpu.get_tpu_info(), "vmem_capacity_bytes", 128 << 20))
    except Exception:
        vmem_cap = 64 << 20
    # Leave ~8 MiB headroom for Mosaic internal scratch: ~56 MiB on v7x
    # (64 MiB physical), capped at ~100 MiB on v5e/v6e (128 MiB physical).
    vmem_limit = int(
        min(max(est + (4 << 20), 16 << 20), min(vmem_cap - (8 << 20), 100 << 20))
    )

    grid = (N_p // tm_eff, H_p // th)

    # NOTE: for small-N / decode-like shapes on v6e (tm forced small), the
    # W1/W2 specs can additionally take pipeline_mode=pl.Buffered(3) to hide
    # DMA ramp on the weight stream.
    out2d = pl.pallas_call(
        expert_kernel,
        out_shape=jax.ShapeDtypeStruct((N_p, E_p), jnp.float32),
        grid_spec=pltpu.PrefetchScalarGridSpec(
            num_scalar_prefetch=0,
            grid=grid,
            in_specs=[
                pl.BlockSpec((tm_eff, E_p), lambda i, k: (i, 0)),  # x tile (resident over k)
                pl.BlockSpec((E_p, th), lambda i, k: (0, k)),      # W1 slab
                pl.BlockSpec((1, th), lambda i, k: (0, k)),        # b1 slab
                pl.BlockSpec((th, E_p), lambda i, k: (k, 0)),      # W2 slab
                pl.BlockSpec((1, E_p), lambda i, k: (0, 0)),       # b2 (resident)
            ],
            out_specs=pl.BlockSpec((tm_eff, E_p), lambda i, k: (i, 0)),
        ),
        compiler_params=pltpu.CompilerParams(
            dimension_semantics=("parallel", "arbitrary"),
            vmem_limit_bytes=vmem_limit,
        ),
    )(x2d, w1, b1, w2, b2)

    # Padded rows/cols are sliced off (padded rows contain b2, harmless here).
    return out2d[:N, :E].reshape(B, T, E)


def expert_reference_f32(x, w1, b1, w2, b2):
    h = jnp.maximum(jnp.einsum("bte,eh->bth", x, w1) + b1, 0.0)
    return jnp.einsum("bth,he->bte", h, w2) + b2


def expert_reference_bf16(x, w1, b1, w2, b2):
    """Mirrors the kernel's bf16-operand / f32-accumulate numerics."""
    xb = x.astype(jnp.bfloat16)
    h = jnp.einsum(
        "bte,eh->bth", xb, w1.astype(jnp.bfloat16),
        preferred_element_type=jnp.float32,
    ) + b1
    h = jnp.maximum(h, 0.0)
    y = jnp.einsum(
        "bth,he->bte", h.astype(jnp.bfloat16), w2.astype(jnp.bfloat16),
        preferred_element_type=jnp.float32,
    ) + b2
    return y


if __name__ == "__main__":
    # Small, deterministic setup: batch=2, seq=8, n_embed=32 (hidden = 4*32 = 128).
    B, T, E = 2, 8, 32
    H = 4 * E

    key = jax.random.PRNGKey(0)
    kx, kw1, kb1, kw2, kb2 = jax.random.split(key, 5)

    x = jax.random.normal(kx, (B, T, E), dtype=jnp.float32)

    # Deterministic parameter init (uniform, PyTorch-Linear-like scaling).
    lim1 = 1.0 / (E ** 0.5)
    lim2 = 1.0 / (H ** 0.5)
    w1 = jax.random.uniform(kw1, (E, H), jnp.float32, -lim1, lim1)
    b1 = jax.random.uniform(kb1, (H,), jnp.float32, -lim1, lim1)
    w2 = jax.random.uniform(kw2, (H, E), jnp.float32, -lim2, lim2)
    b2 = jax.random.uniform(kb2, (E,), jnp.float32, -lim2, lim2)

    # One-time weight prep (pad + bf16 cast hoisted out of the forward).
    params = prepare_expert_params(w1, b1, w2, b2)

    out = expert_forward(x, params)
    out = jax.block_until_ready(out)
    assert out.shape == (B, T, E)

    # Tight check vs a reference with identical bf16-operand numerics.
    ref_bf16 = expert_reference_bf16(x, w1, b1, w2, b2)
    assert jnp.allclose(out, ref_bf16, atol=2e-3, rtol=2e-3), "mismatch vs bf16 reference"

    # Loose check vs the full-f32 reference (bf16 quantization tolerance).
    ref_f32 = expert_reference_f32(x, w1, b1, w2, b2)
    assert jnp.allclose(out, ref_f32, atol=5e-2, rtol=5e-2), "mismatch vs f32 reference"

    print("KERNEL_OK")
</pallas_src>

<mosaic_0001>
module attributes {stable_mosaic.version = 11 : i64} {
  func.func @expert_kernel(%arg0: i32, %arg1: i32, %arg2: memref<8x128xbf16, #tpu.memory_space<vmem>>, %arg3: memref<128x128xbf16, #tpu.memory_space<vmem>>, %arg4: memref<1x128xf32, #tpu.memory_space<vmem>>, %arg5: memref<128x128xbf16, #tpu.memory_space<vmem>>, %arg6: memref<1x128xf32, #tpu.memory_space<vmem>>, %arg7: memref<8x128xf32, #tpu.memory_space<vmem>>) attributes {dimension_semantics = [#tpu.dimension_semantics<parallel>, #tpu.dimension_semantics<arbitrary>], iteration_bounds = array<i64: 2, 1>, scalar_prefetch = 0 : i64, scratch_operands = 0 : i64, tpu.core_type = #tpu.core_type<tc>, window_params = [{transform_indices = @transform_0, window_bounds = array<i64: 8, 128>}, {transform_indices = @transform_1, window_bounds = array<i64: 128, 128>}, {transform_indices = @transform_2, window_bounds = array<i64: 1, 128>}, {transform_indices = @transform_3, window_bounds = array<i64: 128, 128>}, {pipeline_mode = #tpu.pipeline_mode<synchronous>, transform_indices = @transform_4, window_bounds = array<i64: 1, 128>}, {transform_indices = @transform_5, window_bounds = array<i64: 8, 128>}]} {
    %c0_i32 = arith.constant 0 : i32
    %0 = arith.cmpi eq, %arg1, %c0_i32 : i32
    %1 = arith.extui %0 : i1 to i32
    %c0_i32_0 = arith.constant 0 : i32
    %2 = arith.cmpi ne, %1, %c0_i32_0 : i32
    scf.if %2 {
      %c0_14 = arith.constant 0 : index
      %c0_15 = arith.constant 0 : index
      %17 = vector.load %arg6[%c0_14, %c0_15] : memref<1x128xf32, #tpu.memory_space<vmem>>, vector<1x128xf32>
      %18 = vector.shape_cast %17 : vector<1x128xf32> to vector<1x128xf32>
      %19 = vector.broadcast %18 : vector<1x128xf32> to vector<8x128xf32>
      %c0_16 = arith.constant 0 : index
      %c0_17 = arith.constant 0 : index
      %20 = vector.load %arg7[%c0_16, %c0_17] : memref<8x128xf32, #tpu.memory_space<vmem>>, vector<8x128xf32>
      tpu.vector_store %arg7[%c0_16, %c0_17], %19 {strides = array<i32>} : memref<8x128xf32, #tpu.memory_space<vmem>>, vector<8x128xf32>,
    } else {
    }
    %c0 = arith.constant 0 : index
    %c0_1 = arith.constant 0 : index
    %3 = vector.load %arg2[%c0, %c0_1] : memref<8x128xbf16, #tpu.memory_space<vmem>>, vector<8x128xbf16>
    %c0_2 = arith.constant 0 : index
    %c0_3 = arith.constant 0 : index
    %4 = vector.load %arg3[%c0_2, %c0_3] : memref<128x128xbf16, #tpu.memory_space<vmem>>, vector<128x128xbf16>
    %cst = arith.constant dense<0.000000e+00> : vector<8x128xf32>
    %5 = tpu.matmul %3, %4, %cst {dimension_numbers = #tpu.dot_dimension_numbers<[1], [0], [0], [1], [0, 0, 1, 1], [], []>} : vector<8x128xbf16>, vector<128x128xbf16>, vector<8x128xf32> -> vector<8x128xf32>
    %c0_4 = arith.constant 0 : index
    %c0_5 = arith.constant 0 : index
    %6 = vector.load %arg4[%c0_4, %c0_5] : memref<1x128xf32, #tpu.memory_space<vmem>>, vector<1x128xf32>
    %7 = vector.broadcast %6 : vector<1x128xf32> to vector<8x128xf32>
    %8 = arith.addf %5, %7 : vector<8x128xf32>
    %cst_6 = arith.constant 0.000000e+00 : f32
    %9 = vector.broadcast %cst_6 : f32 to vector<8x128xf32>
    %10 = arith.maximumf %8, %9 : vector<8x128xf32>
    %c0_7 = arith.constant 0 : index
    %c0_8 = arith.constant 0 : index
    %11 = vector.load %arg7[%c0_7, %c0_8] : memref<8x128xf32, #tpu.memory_space<vmem>>, vector<8x128xf32>
    %12 = arith.truncf %10 : vector<8x128xf32> to vector<8x128xbf16>
    %c0_9 = arith.constant 0 : index
    %c0_10 = arith.constant 0 : index
    %13 = vector.load %arg5[%c0_9, %c0_10] : memref<128x128xbf16, #tpu.memory_space<vmem>>, vector<128x128xbf16>
    %cst_11 = arith.constant dense<0.000000e+00> : vector<8x128xf32>
    %14 = tpu.matmul %12, %13, %cst_11 {dimension_numbers = #tpu.dot_dimension_numbers<[1], [0], [0], [1], [0, 0, 1, 1], [], []>} : vector<8x128xbf16>, vector<128x128xbf16>, vector<8x128xf32> -> vector<8x128xf32>
    %15 = arith.addf %11, %14 : vector<8x128xf32>
    %c0_12 = arith.constant 0 : index
    %c0_13 = arith.constant 0 : index
    %16 = vector.load %arg7[%c0_12, %c0_13] : memref<8x128xf32, #tpu.memory_space<vmem>>, vector<8x128xf32>
    tpu.vector_store %arg7[%c0_12, %c0_13], %15 {strides = array<i32>} : memref<8x128xf32, #tpu.memory_space<vmem>>, vector<8x128xf32>,
    return
  }
  func.func @transform_0(%arg0: i32, %arg1: i32) -> (i32, i32) {
    %c0_i32 = arith.constant 0 : i32
    %c0_i32_0 = arith.constant 0 : i32
    return %arg0, %c0_i32 : i32, i32
  }
  func.func @transform_1(%arg0: i32, %arg1: i32) -> (i32, i32) {
    %c0_i32 = arith.constant 0 : i32
    %c0_i32_0 = arith.constant 0 : i32
    return %c0_i32, %arg1 : i32, i32
  }
  func.func @transform_2(%arg0: i32, %arg1: i32) -> (i32, i32) {
    %c0_i32 = arith.constant 0 : i32
    %c0_i32_0 = arith.constant 0 : i32
    return %c0_i32, %arg1 : i32, i32
  }
  func.func @transform_3(%arg0: i32, %arg1: i32) -> (i32, i32) {
    %c0_i32 = arith.constant 0 : i32
    %c0_i32_0 = arith.constant 0 : i32
    return %arg1, %c0_i32 : i32, i32
  }
  func.func @transform_4(%arg0: i32, %arg1: i32) -> (i32, i32) {
    %c0_i32 = arith.constant 0 : i32
    %c0_i32_0 = arith.constant 0 : i32
    %c0_i32_1 = arith.constant 0 : i32
    return %c0_i32, %c0_i32_0 : i32, i32
  }
  func.func @transform_5(%arg0: i32, %arg1: i32) -> (i32, i32) {
    %c0_i32 = arith.constant 0 : i32
    %c0_i32_0 = arith.constant 0 : i32
    return %arg0, %c0_i32 : i32, i32
  }
}

</mosaic_0001>

<llo_original>
// kernel: tpu_custom_call.1
$region0: #{tpu_custom_call.1}
  #allocation0 [shape = 'u32[]', space=smem, size = 0x4, offset = 0x4, fixed_abs, tag = 'smem constant byte address 0x4 - core index']
  #allocation1 [shape = 'u32[72,128]{1,0:T(1,128)}', space=vmem, size = 0x9000, scoped, tag = 'internal scratch']
  %s0 = inlined_call_operand.hbm [shape: bf16[16,128], index: 0, kind: input, shape index: {}]
  %s1 = inlined_call_operand.hbm [shape: bf16[128,128], index: 1, kind: input, shape index: {}]
  %s2 = inlined_call_operand.vmem [shape: f32[1,128], index: 2, kind: input, shape index: {}]
  %s3 = inlined_call_operand.hbm [shape: bf16[128,128], index: 3, kind: input, shape index: {}]
  %s4 = inlined_call_operand.vmem [shape: f32[1,128], index: 4, kind: input, shape index: {}]
  %s5 = inlined_call_operand.hbm [shape: f32[16,128], index: 5, kind: output, shape index: {}]
  %s6 = sld [smem:[#allocation0]]
  $region69: #{tpu_custom_call.1} parent=0
    _
  %s8 = ssub.s32 1, %s6
  %s9 = scalar_select 0, %s8, %s6
  $region1: #{tpu_custom_call.1} parent=0
    #allocation2 [shape = 'u8[4096]{0}', space=vmem, size = 0x1000, scoped, tag = 'input window, operand 0']
    #allocation3 [shape = 's32[2]{0}', space=sflag, size = 0x8, scoped, tag = 'scoped memory for tpu_custom_call.1']
    #allocation4 [shape = 's32[2]{0}', space=sflag, size = 0x8, scoped, tag = 'scoped memory for tpu_custom_call.1']
    #allocation5 [shape = 'u8[32768]{0}', space=vmem, size = 0x8000, scoped, tag = 'input window, operand 1, single buffered']
    #allocation6 [shape = 's32[1]{0}', space=sflag, size = 0x4, scoped, tag = 'scoped memory for tpu_custom_call.1']
    #allocation7 [shape = 'u8[32768]{0}', space=vmem, size = 0x8000, scoped, tag = 'input window, operand 3, single buffered']
    #allocation8 [shape = 'u8[8192]{0}', space=vmem, size = 0x2000, scoped, tag = 'output window, operand 0']
    %10 = vsyncpa [#allocation3], 0
    %s11 = scalar_lea.sflag [#allocation3], 1
    %12 = vsyncpa %s11, 0
    %13 = vsyncpa [#allocation6], 0
    %14 = vsyncpa [#allocation4], 0
    %s15 = scalar_lea.sflag [#allocation4], 1
    %16 = vsyncpa %s15, 0
    loop: start=0, step=1, limit=4
    $region2: #{tpu_custom_call.1} parent=1 // loop_pre_header
      _
    $region3: #{tpu_custom_call.1} parent=1 // loop_header
      %s18 = sphi 0, %s22
      %p19 = scmp.ge.s32.totalorder %s18, 4
      %s25 = sphi 0, %s37
      %s26 = sphi 0, %s33
      %s27 = sphi 0, %s25
      %s28 = sphi 0, %s26
      %s29 = sphi 0, %s27
      %s30 = sphi 0, %s28
      %s40 = sphi 0, %s42
      %s43 = sphi 0, %s40
      %s44 = sphi 0, %s43
      %s60 = sphi 0, %s44
      %s66 = sphi 0, %s68
      %s69 = sphi 0, %s66
      %s70 = sphi 0, %s69
      %s86 = sphi 0, %s70
      %s92 = sphi 0, %s94
      %s95 = sphi 0, %s92
      %s96 = sphi 0, %s95
      %s112 = sphi 0, %s96
      %s118 = sphi 0, %s120
      %s121 = sphi 0, %s118
      %s122 = sphi 0, %s121
      %s138 = sphi 0, %s122
      %s142 = sphi 0, %s142
      %s144 = sphi 0, %s142
      %s145 = sphi 0, %s144
      %s159 = sphi 0, %s145
      %s165 = sphi 0, %s167
      %s168 = sphi 0, %s165
      %s169 = sphi 0, %s168
      %s185 = sphi 0, %s169
    $region4: #{tpu_custom_call.1} parent=1 // loop_header_branch
      %21 = sbr.rel (%p19) target = $region8
    $region5: #{tpu_custom_call.1} parent=1 // loop_body
      %s23 = ssub.s32 %s18, 1
      %s24 = ssub.s32 %s18, 2
      %s31 = sadd.s32 1, %s26
      %p32 = scmp.ge.s32.totalorder %s31, 1
      %s33 = scalar_select %p32, 0, %s31
      %s34 = sadd.s32 1, %s25
      %s35 = scalar_select %p32, %s34, %s25
      %p36 = scmp.ge.s32.totalorder %s35, 2
      %s37 = scalar_select %p36, 0, %s35
      %s38 = ssub.s32 %s25, %s37
      %p39 = scmp.eq.s32.totalorder %s38, 0
      %s41 = sadd.s32 %s40, 1
      %s42 = scalar_select %p39, %s40, %s41
      %p45 = pneg %p39
      %p46 = scmp.eq.s32.totalorder %s18, 1
      %p47 = por %p45, %p46
      %p48 = scmp.ne.s32.totalorder %s40, %s43
      %p49 = scmp.eq.s32.totalorder %s18, 0
      %p50 = por %p48, %p49
      %p51 = scmp.ne.s32.totalorder %s40, %s43
      %p52 = scmp.eq.s32.totalorder %s23, 1
      %p53 = por %p51, %p52
      %p54 = scmp.ne.s32.totalorder %s43, %s44
      %p55 = scmp.eq.s32.totalorder %s23, 0
      %p56 = por %p54, %p55
      %p57 = scmp.ne.s32.totalorder %s43, %s44
      %p58 = scmp.eq.s32.totalorder %s24, 1
      %p59 = por %p57, %p58
      %p61 = scmp.ne.s32.totalorder %s44, %s60
      %p62 = scmp.eq.s32.totalorder %s24, 0
      %p63 = por %p61, %p62
      %s64 = ssub.s32 %s26, %s33
      %p65 = scmp.eq.s32.totalorder %s64, 0
      %s67 = sadd.s32 %s66, 1
      %s68 = scalar_select %p65, %s66, %s67
      %p71 = pneg %p65
      %p72 = scmp.eq.s32.totalorder %s18, 1
      %p73 = por %p71, %p72
      %p74 = scmp.ne.s32.totalorder %s66, %s69
      %p75 = scmp.eq.s32.totalorder %s18, 0
      %p76 = por %p74, %p75
      %p77 = scmp.ne.s32.totalorder %s66, %s69
      %p78 = scmp.eq.s32.totalorder %s23, 1
      %p79 = por %p77, %p78
      %p80 = scmp.ne.s32.totalorder %s69, %s70
      %p81 = scmp.eq.s32.totalorder %s23, 0
      %p82 = por %p80, %p81
      %p83 = scmp.ne.s32.totalorder %s69, %s70
      %p84 = scmp.eq.s32.totalorder %s24, 1
      %p85 = por %p83, %p84
      %p87 = scmp.ne.s32.totalorder %s70, %s86
      %p88 = scmp.eq.s32.totalorder %s24, 0
      %p89 = por %p87, %p88
      %s90 = ssub.s32 %s26, %s33
      %p91 = scmp.eq.s32.totalorder %s90, 0
      %s93 = sadd.s32 %s92, 1
      %s94 = scalar_select %p91, %s92, %s93
      %p97 = pneg %p91
      %p98 = scmp.eq.s32.totalorder %s18, 1
      %p99 = por %p97, %p98
      %p100 = scmp.ne.s32.totalorder %s92, %s95
      %p101 = scmp.eq.s32.totalorder %s18, 0
      %p102 = por %p100, %p101
      %p103 = scmp.ne.s32.totalorder %s92, %s95
      %p104 = scmp.eq.s32.totalorder %s23, 1
      %p105 = por %p103, %p104
      %p106 = scmp.ne.s32.totalorder %s95, %s96
      %p107 = scmp.eq.s32.totalorder %s23, 0
      %p108 = por %p106, %p107
      %p109 = scmp.ne.s32.totalorder %s95, %s96
      %p110 = scmp.eq.s32.totalorder %s24, 1
      %p111 = por %p109, %p110
      %p113 = scmp.ne.s32.totalorder %s96, %s112
      %p114 = scmp.eq.s32.totalorder %s24, 0
      %p115 = por %p113, %p114
      %s116 = ssub.s32 %s26, %s33
      %p117 = scmp.eq.s32.totalorder %s116, 0
      %s119 = sadd.s32 %s118, 1
      %s120 = scalar_select %p117, %s118, %s119
      %p123 = pneg %p117
      %p124 = scmp.eq.s32.totalorder %s18, 1
      %p125 = por %p123, %p124
      %p126 = scmp.ne.s32.totalorder %s118, %s121
      %p127 = scmp.eq.s32.totalorder %s18, 0
      %p128 = por %p126, %p127
      %p129 = scmp.ne.s32.totalorder %s118, %s121
      %p130 = scmp.eq.s32.totalorder %s23, 1
      %p131 = por %p129, %p130
      %p132 = scmp.ne.s32.totalorder %s121, %s122
      %p133 = scmp.eq.s32.totalorder %s23, 0
      %p134 = por %p132, %p133
      %p135 = scmp.ne.s32.totalorder %s121, %s122
      %p136 = scmp.eq.s32.totalorder %s24, 1
      %p137 = por %p135, %p136
      %p139 = scmp.ne.s32.totalorder %s122, %s138
      %p140 = scmp.eq.s32.totalorder %s24, 0
      %p141 = por %p139, %p140
      %s143 = sadd.s32 %s142, 1
      %p146 = scmp.eq.s32.totalorder %s18, 1
      %p147 = scmp.ne.s32.totalorder %s142, %s144
      %p148 = scmp.eq.s32.totalorder %s18, 0
      %p149 = por %p147, %p148
      %p150 = scmp.ne.s32.totalorder %s142, %s144
      %p151 = scmp.eq.s32.totalorder %s23, 1
      %p152 = por %p150, %p151
      %p153 = scmp.ne.s32.totalorder %s144, %s145
      %p154 = scmp.eq.s32.totalorder %s23, 0
      %p155 = por %p153, %p154
      %p156 = scmp.ne.s32.totalorder %s144, %s145
      %p157 = scmp.eq.s32.totalorder %s24, 1
      %p158 = por %p156, %p157
      %p160 = scmp.ne.s32.totalorder %s145, %s159
      %p161 = scmp.eq.s32.totalorder %s24, 0
      %p162 = por %p160, %p161
      %s163 = ssub.s32 %s25, %s37
      %p164 = scmp.eq.s32.totalorder %s163, 0
      %s166 = sadd.s32 %s165, 1
      %s167 = scalar_select %p164, %s165, %s166
      %p170 = pneg %p164
      %p171 = scmp.eq.s32.totalorder %s18, 1
      %p172 = por %p170, %p171
      %p173 = scmp.ne.s32.totalorder %s165, %s168
      %p174 = scmp.eq.s32.totalorder %s18, 0
      %p175 = por %p173, %p174
      %p176 = scmp.ne.s32.totalorder %s165, %s168
      %p177 = scmp.eq.s32.totalorder %s23, 1
      %p178 = por %p176, %p177
      %p179 = scmp.ne.s32.totalorder %s168, %s169
      %p180 = scmp.eq.s32.totalorder %s23, 0
      %p181 = por %p179, %p180
      %p182 = scmp.ne.s32.totalorder %s168, %s169
      %p183 = scmp.eq.s32.totalorder %s24, 1
      %p184 = por %p182, %p183
      %p186 = scmp.ne.s32.totalorder %s169, %s185
      %p187 = scmp.eq.s32.totalorder %s24, 0
      %p188 = por %p186, %p187
      %p189 = scmp.le.s32.totalorder 1, %s18
      %p190 = scmp.lt.s32.totalorder %s18, 3
      %p191 = pnand %p189, %p190
      %p192 = pneg %p191
      // Predicated region
      $region9: #{tpu_custom_call.1} parent=5 // pred_check
        _
      $region10: #{tpu_custom_call.1} parent=5 // pred_check_branch
        %194 = sbr.rel (%p191) target = $region12
      $region11: #{tpu_custom_call.1} parent=5 // pred_region
        %s195 = ssub.s32 %s18, 1
        // Predicated region
        $region13: #{tpu_custom_call.1} parent=11 // pred_check
          %p196 = pneg %p82
        $region14: #{tpu_custom_call.1} parent=11 // pred_check_branch
          %198 = sbr.rel (%p196) target = $region16
        $region15: #{tpu_custom_call.1} parent=11 // pred_region
          %200 = vsyncadd [#allocation6], 0
          %s201 = smul.addr %s28, 4
          %s202 = scalar_lea.hbm %s1, %s201
          %s203 = sshll.u32 %s202, 4
          %s204 = int_to_ptr.hbm [resolvable:$true] %s203
          %s205 = sshll.u32 [#allocation5], 4
          %s206 = int_to_ptr.vmem [resolvable:$true] %s205
          %211 = dma.hbm_to_vmem [thread:$0]  %s204, 1024, %s206, [#allocation6], 64, 64, 4
        $region16: #{tpu_custom_call.1} parent=11 // pred_fallthru
          _
        // Predicated region
        $region17: #{tpu_custom_call.1} parent=11 // pred_check
          %p212 = pneg %p108
        $region18: #{tpu_custom_call.1} parent=11 // pred_check_branch
          %214 = sbr.rel (%p212) target = $region20
        $region19: #{tpu_custom_call.1} parent=11 // pred_region
          %p215 = scmp.lt.s32.totalorder %s28, 0
          %s216 = scalar_select %p215, %s28, 0
          %s217 = scalar_lea.vmem %s2, %s216
        $region20: #{tpu_custom_call.1} parent=11 // pred_fallthru
          _
        // Predicated region
        $region21: #{tpu_custom_call.1} parent=11 // pred_check
          %p218 = pneg %p134
        $region22: #{tpu_custom_call.1} parent=11 // pred_check_branch
          %220 = sbr.rel (%p218) target = $region24
        $region23: #{tpu_custom_call.1} parent=11 // pred_region
          %s221 = smul.u32 16, %s28
          %223 = vsyncadd [#allocation6], 0
          %s224 = smul.addr %s221, 4
          %s225 = scalar_lea.hbm %s3, %s224
          %s226 = sshll.u32 %s225, 4
          %s227 = int_to_ptr.hbm [resolvable:$true] %s226
          %s228 = sshll.u32 [#allocation7], 4
          %s229 = int_to_ptr.vmem [resolvable:$true] %s228
          %234 = dma.hbm_to_vmem [thread:$0]  %s227, 1024, %s229, [#allocation6], 64, 64, 4
        $region24: #{tpu_custom_call.1} parent=11 // pred_fallthru
          _
        // Predicated region
        $region25: #{tpu_custom_call.1} parent=11 // pred_check
          %p235 = pneg %p155
        $region26: #{tpu_custom_call.1} parent=11 // pred_check_branch
          %237 = sbr.rel (%p235) target = $region28
        $region27: #{tpu_custom_call.1} parent=11 // pred_region
          _
        $region28: #{tpu_custom_call.1} parent=11 // pred_fallthru
          _
      $region12: #{tpu_custom_call.1} parent=5 // pred_fallthru
        _
      %p238 = scmp.lt.s32.totalorder %s18, 2
      // Predicated region
      $region29: #{tpu_custom_call.1} parent=5 // pred_check
        %p239 = pneg %p238
      $region30: #{tpu_custom_call.1} parent=5 // pred_check_branch
        %241 = sbr.rel (%p239) target = $region32
      $region31: #{tpu_custom_call.1} parent=5 // pred_region
        // Predicated region
        $region33: #{tpu_custom_call.1} parent=31 // pred_check
          %p242 = pneg %p50
        $region34: #{tpu_custom_call.1} parent=31 // pred_check_branch
          %244 = sbr.rel (%p242) target = $region36
        $region35: #{tpu_custom_call.1} parent=31 // pred_region
          %s245 = sand.u32 %s40, 1
          %s246 = scalar_lea.sflag [#allocation3], %s245
          %s247 = sand.u32 %s40, 1
          %s248 = smul.addr %s247, 4
          %s249 = scalar_lea.vmem [#allocation2], %s248
          %251 = vsyncadd %s246, 0
          %s252 = smul.addr %s25, 4
          %s253 = scalar_lea.hbm %s0, %s252
          %s255 = sshll.u32 %s253, 4
          %s256 = int_to_ptr.hbm [resolvable:$true] %s255
          %s257 = sshll.u32 %s249, 4
          %s258 = int_to_ptr.vmem [resolvable:$true] %s257
          %260 = dma.hbm_to_vmem [thread:$0]  %s256, 64, %s258, %s246
        $region36: #{tpu_custom_call.1} parent=31 // pred_fallthru
          _
      $region32: #{tpu_custom_call.1} parent=5 // pred_fallthru
        _
      %p261 = scmp.le.s32.totalorder 1, %s18
      %p262 = scmp.lt.s32.totalorder %s18, 3
      %p263 = pnand %p261, %p262
      %p264 = pneg %p263
      // Predicated region
      $region37: #{tpu_custom_call.1} parent=5 // pred_check
        _
      $region38: #{tpu_custom_call.1} parent=5 // pred_check_branch
        %266 = sbr.rel (%p263) target = $region40
      $region39: #{tpu_custom_call.1} parent=5 // pred_region
        %s267 = ssub.s32 %s18, 1
        %s268 = sand.u32 %s43, 1
        %s269 = scalar_lea.sflag [#allocation3], %s268
        %s270 = sand.u32 %s43, 1
        %s271 = smul.addr %s270, 4
        %s272 = scalar_lea.vmem [#allocation2], %s271
        // Predicated region
        $region41: #{tpu_custom_call.1} parent=39 // pred_check
          %p273 = pneg %p56
        $region42: #{tpu_custom_call.1} parent=39 // pred_check_branch
          %275 = sbr.rel (%p273) target = $region44
        $region43: #{tpu_custom_call.1} parent=39 // pred_region
          %277 = dma.done %s269, 64
        $region44: #{tpu_custom_call.1} parent=39 // pred_fallthru
          _
        // Predicated region
        $region45: #{tpu_custom_call.1} parent=39 // pred_check
          %p278 = pneg %p82
        $region46: #{tpu_custom_call.1} parent=39 // pred_check_branch
          %280 = sbr.rel (%p278) target = $region48
        $region47: #{tpu_custom_call.1} parent=39 // pred_region
          %282 = dma.done [#allocation6], 1024
        $region48: #{tpu_custom_call.1} parent=39 // pred_fallthru
          _
        // Predicated region
        $region49: #{tpu_custom_call.1} parent=39 // pred_check
          %p283 = pneg %p134
        $region50: #{tpu_custom_call.1} parent=39 // pred_check_branch
          %285 = sbr.rel (%p283) target = $region52
        $region51: #{tpu_custom_call.1} parent=39 // pred_region
          %287 = dma.done [#allocation6], 1024
        $region52: #{tpu_custom_call.1} parent=39 // pred_fallthru
          _
        %s288 = sand.u32 %s43, 1
        %s289 = scalar_lea.sflag [#allocation3], %s288
        %s290 = sand.u32 %s43, 1
        %s291 = smul.addr %s290, 4
        %s292 = scalar_lea.vmem [#allocation2], %s291
        %p293 = pneg %p56
        %p294 = pneg %p53
        %p295 = pneg %p82
        %p296 = pneg %p79
        %p297 = scmp.lt.s32.totalorder %s28, 0
        %s298 = scalar_select %p297, %s28, 0
        %s299 = scalar_lea.vmem %s2, %s298
        %p300 = pneg %p108
        %p301 = pneg %p105
        %p302 = pneg %p134
        %p303 = pneg %p131
        %p304 = pneg %p155
        %p305 = pneg %p152
        %p306 = pneg %p181
        %p307 = pneg %p178
        %s308 = sand.u32 %s168, 1
        %s309 = scalar_lea.sflag [#allocation4], %s308
        %s310 = sand.u32 %s168, 1
        %s311 = smul.addr %s310, 8
        %s312 = scalar_lea.vmem [#allocation8], %s311
        %p313 = scmp.lt.s32.totalorder %s28, 0
        %s314 = scalar_select %p313, %s28, 0
        %s315 = scalar_lea.vmem %s2, %s314
        %s316 = smul.u32 16, %s28
        %p317 = scmp.eq.s32.totalorder %s28, 0
        // Predicated region
        $region53: #{tpu_custom_call.1} parent=39 // pred_check
          %p318 = pneg %p317
        $region54: #{tpu_custom_call.1} parent=39 // pred_check_branch
          %320 = sbr.rel (%p318) target = $region56
        $region55: #{tpu_custom_call.1} parent=39 // pred_region
          %v321 = vld [vmem:[%s4] sm:$0x1]
          %v323 = vperm.slane %v321, 0
          %325 = vst [vmem:[%s312] sm:$0xff] %v323
        $region56: #{tpu_custom_call.1} parent=39 // pred_fallthru
          _
        %v326 = vld [vmem:[%s272] sm:$0xf]
        %v327 = vld [vmem:[#allocation5] sm:$0xf]
        %v328 = vld [vmem:[#allocation5 + $0x4] sm:$0xf]
        %v329 = vld [vmem:[#allocation5 + $0x8] sm:$0xf]
        %v330 = vld [vmem:[#allocation5 + $0xc] sm:$0xf]
        %v331 = vld [vmem:[#allocation5 + $0x10] sm:$0xf]
        %v332 = vld [vmem:[#allocation5 + $0x14] sm:$0xf]
        %v333 = vld [vmem:[#allocation5 + $0x18] sm:$0xf]
        %v334 = vld [vmem:[#allocation5 + $0x1c] sm:$0xf]
        %v335 = vld [vmem:[#allocation5 + $0x20] sm:$0xf]
        %v336 = vld [vmem:[#allocation5 + $0x24] sm:$0xf]
        %v337 = vld [vmem:[#allocation5 + $0x28] sm:$0xf]
        %v338 = vld [vmem:[#allocation5 + $0x2c] sm:$0xf]
        %v339 = vld [vmem:[#allocation5 + $0x30] sm:$0xf]
        %v340 = vld [vmem:[#allocation5 + $0x34] sm:$0xf]
        %v341 = vld [vmem:[#allocation5 + $0x38] sm:$0xf]
        %v342 = vld [vmem:[#allocation5 + $0x3c] sm:$0xf]
        %v343 = vld [vmem:[%s315] sm:$0x1]
        %v345 = vperm.slane %v343, 0
        %v363 = vunpack.c.l.b16 %v327
        %v364 = vunpack.c.l.b16 %v328
        %v365 = vunpack.c.l.b16 %v329
        %v366 = vunpack.c.l.b16 %v330
        %v367 = vunpack.c.l.b16 %v331
        %v368 = vunpack.c.l.b16 %v332
        %v369 = vunpack.c.l.b16 %v333
        %v370 = vunpack.c.l.b16 %v334
        %v371 = vunpack.c.l.b16 %v335
        %v372 = vunpack.c.l.b16 %v336
        %v373 = vunpack.c.l.b16 %v337
        %v374 = vunpack.c.l.b16 %v338
        %v375 = vunpack.c.l.b16 %v339
        %v376 = vunpack.c.l.b16 %v340
        %v377 = vunpack.c.l.b16 %v341
        %v378 = vunpack.c.l.b16 %v342
        %v379 = vpack.c.b16 %v364, %v363
        %v380 = vpack.c.b16 %v366, %v365
        %v381 = vpack.c.b16 %v368, %v367
        %v382 = vpack.c.b16 %v370, %v369
        %v383 = vpack.c.b16 %v372, %v371
        %v384 = vpack.c.b16 %v374, %v373
        %v385 = vpack.c.b16 %v376, %v375
        %v386 = vpack.c.b16 %v378, %v377
        %395 = vmatpush.bf16.msra.mxu0 %v386
        %396 = vmatpush.bf16.msra.mxu0 %v385
        %397 = vmatpush.bf16.msra.mxu0 %v384
        %398 = vmatpush.bf16.msra.mxu0 %v383
        %399 = vmatpush.bf16.msra.mxu0 %v382
        %400 = vmatpush.bf16.msra.mxu0 %v381
        %401 = vmatpush.bf16.msra.mxu0 %v380
        %402 = vmatpush.bf16.msra.mxu0 %v379
        %403 = vmatmul.bf16.gmra.mxu0 %v326
        %v404 = vpop.f32.mrf.mxu0
        %v405 = vadd.f32 %v345, %v404
        %v406 = vpop.f32.mrf.mxu0
        %407 = vdwg.mxu0
        %v408 = vmax.f32 %v405, 0.0
        %v409 = vld [vmem:[%s312] sm:$0xff]
        %v410 = vpack.c.bf16 %v408, %v408
        %v411 = vld [vmem:[#allocation7] sm:$0xf]
        %v412 = vld [vmem:[#allocation7 + $0x4] sm:$0xf]
        %v413 = vld [vmem:[#allocation7 + $0x8] sm:$0xf]
        %v414 = vld [vmem:[#allocation7 + $0xc] sm:$0xf]
        %v415 = vld [vmem:[#allocation7 + $0x10] sm:$0xf]
        %v416 = vld [vmem:[#allocation7 + $0x14] sm:$0xf]
        %v417 = vld [vmem:[#allocation7 + $0x18] sm:$0xf]
        %v418 = vld [vmem:[#allocation7 + $0x1c] sm:$0xf]
        %v419 = vld [vmem:[#allocation7 + $0x20] sm:$0xf]
        %v420 = vld [vmem:[#allocation7 + $0x24] sm:$0xf]
        %v421 = vld [vmem:[#allocation7 + $0x28] sm:$0xf]
        %v422 = vld [vmem:[#allocation7 + $0x2c] sm:$0xf]
        %v423 = vld [vmem:[#allocation7 + $0x30] sm:$0xf]
        %v424 = vld [vmem:[#allocation7 + $0x34] sm:$0xf]
        %v425 = vld [vmem:[#allocation7 + $0x38] sm:$0xf]
        %v426 = vld [vmem:[#allocation7 + $0x3c] sm:$0xf]
        %v443 = vunpack.c.l.b16 %v411
        %v444 = vunpack.c.l.b16 %v412
        %v445 = vunpack.c.l.b16 %v413
        %v446 = vunpack.c.l.b16 %v414
        %v447 = vunpack.c.l.b16 %v415
        %v448 = vunpack.c.l.b16 %v416
        %v449 = vunpack.c.l.b16 %v417
        %v450 = vunpack.c.l.b16 %v418
        %v451 = vunpack.c.l.b16 %v419
        %v452 = vunpack.c.l.b16 %v420
        %v453 = vunpack.c.l.b16 %v421
        %v454 = vunpack.c.l.b16 %v422
        %v455 = vunpack.c.l.b16 %v423
        %v456 = vunpack.c.l.b16 %v424
        %v457 = vunpack.c.l.b16 %v425
        %v458 = vunpack.c.l.b16 %v426
        %v459 = vpack.c.b16 %v444, %v443
        %v460 = vpack.c.b16 %v446, %v445
        %v461 = vpack.c.b16 %v448, %v447
        %v462 = vpack.c.b16 %v450, %v449
        %v463 = vpack.c.b16 %v452, %v451
        %v464 = vpack.c.b16 %v454, %v453
        %v465 = vpack.c.b16 %v456, %v455
        %v466 = vpack.c.b16 %v458, %v457
        %475 = vmatpush.bf16.msra.mxu0 %v466
        %476 = vmatpush.bf16.msra.mxu0 %v465
        %477 = vmatpush.bf16.msra.mxu0 %v464
        %478 = vmatpush.bf16.msra.mxu0 %v463
        %479 = vmatpush.bf16.msra.mxu0 %v462
        %480 = vmatpush.bf16.msra.mxu0 %v461
        %481 = vmatpush.bf16.msra.mxu0 %v460
        %482 = vmatpush.bf16.msra.mxu0 %v459
        %483 = vmatmul.bf16.gmra.mxu0 %v410
        %v484 = vpop.f32.mrf.mxu0
        %v485 = vadd.f32 0.0, %v484
        %v486 = vpop.f32.mrf.mxu0
        %487 = vdwg.mxu0
        %v488 = vadd.f32 %v409, %v485
        %489 = vst [vmem:[%s312] sm:$0xff] %v488
        %s490 = sand.u32 %s168, 1
        %s491 = scalar_lea.sflag [#allocation4], %s490
        %s492 = sand.u32 %s168, 1
        %s493 = smul.addr %s492, 8
        %s494 = scalar_lea.vmem [#allocation8], %s493
        // Predicated region
        $region57: #{tpu_custom_call.1} parent=39 // pred_check
          %p495 = pneg %p178
        $region58: #{tpu_custom_call.1} parent=39 // pred_check_branch
          %497 = sbr.rel (%p495) target = $region60
        $region59: #{tpu_custom_call.1} parent=39 // pred_region
          %499 = vsyncadd %s491, 0
          %s500 = smul.addr %s27, 8
          %s501 = scalar_lea.hbm %s5, %s500
          %s503 = sshll.u32 %s494, 4
          %s504 = int_to_ptr.vmem [resolvable:$true] %s503
          %s505 = sshll.u32 %s501, 4
          %s506 = int_to_ptr.hbm [resolvable:$true] %s505
          %508 = dma.vmem_to_hbm [thread:$0]  %s504, 128, %s506, %s491
        $region60: #{tpu_custom_call.1} parent=39 // pred_fallthru
          _
      $region40: #{tpu_custom_call.1} parent=5 // pred_fallthru
        _
      %p509 = scmp.le.s32.totalorder 2, %s18
      // Predicated region
      $region61: #{tpu_custom_call.1} parent=5 // pred_check
        %p510 = pneg %p509
      $region62: #{tpu_custom_call.1} parent=5 // pred_check_branch
        %512 = sbr.rel (%p510) target = $region64
      $region63: #{tpu_custom_call.1} parent=5 // pred_region
        %s513 = ssub.s32 %s18, 2
        // Predicated region
        $region65: #{tpu_custom_call.1} parent=63 // pred_check
          %p514 = pneg %p184
        $region66: #{tpu_custom_call.1} parent=63 // pred_check_branch
          %516 = sbr.rel (%p514) target = $region68
        $region67: #{tpu_custom_call.1} parent=63 // pred_region
          %s517 = sand.u32 %s169, 1
          %s518 = scalar_lea.sflag [#allocation4], %s517
          %s519 = sand.u32 %s169, 1
          %s520 = smul.addr %s519, 8
          %s521 = scalar_lea.vmem [#allocation8], %s520
          %523 = dma.done %s518, 128
        $region68: #{tpu_custom_call.1} parent=63 // pred_fallthru
          _
      $region64: #{tpu_custom_call.1} parent=5 // pred_fallthru
        _
    $region6: #{tpu_custom_call.1} parent=1 // loop_footer
      %s22 = sadd.s32 1, %s18
    $region7: #{tpu_custom_call.1} parent=1 // loop_footer_branch
      %17 = sbr.rel target = $region3
    $region8: #{tpu_custom_call.1} parent=1 // loop_exit
      _
    %524 = vsyncpa [#allocation3], 1
    %s525 = scalar_lea.sflag [#allocation3], 1
    %526 = vsyncpa %s525, 1
    %527 = vsyncpa [#allocation6], 1
    %528 = vsyncpa [#allocation4], 1
    %s529 = scalar_lea.sflag [#allocation4], 1
    %530 = vsyncpa %s529, 1

</llo_original>
